<compile_context>
chip_gen: v5e
topology: v5e:2x2
jax: 0.10.0
libtpu: 0.0.40
codegen_flags: <defaults>
</compile_context>

<pallas_src>
import math

import jax
import jax.numpy as jnp
from jax import lax
from jax.experimental import pallas as pl
from jax.experimental.pallas import tpu as pltpu

_INV_SQRT2 = 1.0 / math.sqrt(2.0)


# ----------------------------- kernels ------------------------------------ #

def _gelu_exact(h):
    # torch.nn.GELU() default (approximate='none') -> exact erf formulation.
    return 0.5 * h * (1.0 + lax.erf(h * _INV_SQRT2))


def _maybe_narrow(h, w_dtype):
    # Feed the second GEMM in the weight dtype when it is a sub-32-bit float
    # (bf16/f16) so the MXU runs at its packed peak; accumulation stays f32.
    wd = jnp.dtype(w_dtype)
    if jnp.issubdtype(wd, jnp.floating) and wd.itemsize < 4:
        return h.astype(wd)
    return h


def _ffn_kernel_resident(x_ref, w1_ref, b1_ref, w2_ref, b2_ref, o_ref):
    # Whole hidden dimension resident in VMEM: single pass, direct output store.
    h = jnp.dot(x_ref[...], w1_ref[...], preferred_element_type=jnp.float32)
    h = _gelu_exact(h + b1_ref[...])
    # Dropout(p=0.0) is the identity -> no-op.
    h = _maybe_narrow(h, w2_ref.dtype)
    o_ref[...] = (
        jnp.dot(h, w2_ref[...], preferred_element_type=jnp.float32) + b2_ref[...]
    ).astype(o_ref.dtype)


def _ffn_kernel_tiled(x_ref, w1_ref, b1_ref, w2_ref, b2_ref, o_ref, acc_ref):
    # Hidden dimension split over grid axis 1 (reduction, 'arbitrary').
    # Only used when num_programs(1) >= 2.
    k = pl.program_id(1)
    nk = pl.num_programs(1)

    h = jnp.dot(x_ref[...], w1_ref[...], preferred_element_type=jnp.float32)
    h = _gelu_exact(h + b1_ref[...])
    # Dropout(p=0.0) is the identity -> no-op.
    h = _maybe_narrow(h, w2_ref.dtype)
    partial_out = jnp.dot(h, w2_ref[...], preferred_element_type=jnp.float32)

    @pl.when(k == 0)
    def _():
        acc_ref[...] = partial_out                      # no separate zero-init pass

    @pl.when(jnp.logical_and(k > 0, k < nk - 1))
    def _():
        acc_ref[...] = acc_ref[...] + partial_out

    @pl.when(k == nk - 1)
    def _():
        # Fuse last partial + bias straight into the output store (skip the f32
        # accumulator re-write + re-read; vst is the scarcest slot).
        o_ref[...] = (acc_ref[...] + partial_out + b2_ref[...]).astype(o_ref.dtype)


# --------------------------- tiling heuristics ----------------------------- #

def _round_up(x, m):
    return ((x + m - 1) // m) * m


def _sublane(dtype):
    # 8 rows/sublane-group for 4-byte types, 16 for bf16, 32 for int8/fp8.
    return max(8, 32 // max(1, jnp.dtype(dtype).itemsize))


def _device_vmem_bytes():
    try:
        info = pltpu.get_tpu_info()
        cap = getattr(info, "vmem_capacity_bytes", None)
        if cap:
            return int(cap)
    except Exception:
        pass
    kind = ""
    try:
        kind = jax.devices()[0].device_kind.lower()
    except Exception:
        pass
    if "v7" in kind:
        return 64 << 20
    if any(t in kind for t in ("v5 lite", "v5e", "v5litepod", "v6")):
        return 128 << 20
    return 64 << 20  # conservative default


def _vmem_bytes(tm, th, dim_p, x_it, w_it, resident):
    """Rough VMEM footprint estimate for one grid step (double-buffered specs)."""
    h_it = w_it if w_it < 4 else 4
    b = 2 * 2 * tm * dim_p * x_it          # x + out tiles, double-buffered
    b += 2 * 2 * dim_p * th * w_it         # W1 + W2 blocks, double-buffered
    b += 2 * (th + dim_p) * 4              # biases (generous)
    b += tm * th * 4 + tm * th * h_it      # h temp (f32 pre-GELU + narrowed copy)
    if not resident:
        b += tm * dim_p * 4                # f32 accumulator scratch
    return b


def _hidden_tiles(hidden):
    """Candidate hidden tiles: lane-aligned divisors of hidden, largest first."""
    cands = set()
    for base in (256, 128):
        t = (hidden // base) * base
        while t >= base:
            if hidden % t == 0:
                cands.add(t)
            t -= base
    if not cands:
        return [hidden]        # oddly-sized hidden: single full block
    return sorted(cands, reverse=True)


def _pick_tiles(rows, dim_p, hidden, x_it, w_it, budget, tm_req, sub):
    tm_cap = max(sub, (min(_round_up(tm_req, sub), _round_up(rows, sub)) // sub) * sub)
    raw = (tm_cap, 2048, 1024, 512, 256, 128, 64, 32, 16, 8)
    tm_cands = sorted(
        {max(sub, (min(v, tm_cap) // sub) * sub) for v in raw}, reverse=True)

    # 1) Resident-weights fast path (only with a reasonably large row tile).
    tm_floor = min(tm_cands[0], 128)
    for tm in tm_cands:
        if tm < tm_floor:
            break
        if _vmem_bytes(tm, hidden, dim_p, x_it, w_it, True) <= budget:
            return tm, hidden, True

    # 2) Hidden-tiled reduction. Big tm first (weight HBM traffic scales with the
    #    number of row tiles, not with th), then the largest th that fits.
    th_cands = _hidden_tiles(hidden)
    for tm in tm_cands:
        for th in th_cands:
            if _vmem_bytes(tm, th, dim_p, x_it, w_it, False) <= budget:
                return tm, th, False

    # 3) Last resort: smallest tiles (may spill, but still compiles).
    return tm_cands[-1], th_cands[-1], False


# ------------------------------- wrapper ----------------------------------- #

def feed_forward(x, w1, b1, w2, b2, *, tm=None, th=None):
    """x: (..., dim). w1: (dim, hidden), b1: (hidden,), w2: (hidden, dim), b2: (dim,).
    Weights are stored (in_features, out_features) so the kernel computes x @ W + b."""
    orig_shape = x.shape
    dim = orig_shape[-1]
    hidden = w1.shape[1]
    rows = int(math.prod(orig_shape[:-1])) if len(orig_shape) > 1 else 1

    x2 = x.reshape(rows, dim)

    # Lane-dense layout: pad the model dim to a multiple of 128 with zeros
    # (x cols / W1 rows / W2 cols / b2). Exact: padded columns contribute 0 and
    # padded outputs are sliced off.
    lane_pad = (-dim) % 128
    dim_p = dim + lane_pad
    if lane_pad:
        x2 = jnp.pad(x2, ((0, 0), (0, lane_pad)))
        w1 = jnp.pad(w1, ((0, lane_pad), (0, 0)))
        w2 = jnp.pad(w2, ((0, 0), (0, lane_pad)))
        b2 = jnp.pad(b2, (0, lane_pad))

    x_it = jnp.dtype(x.dtype).itemsize
    w_it = jnp.dtype(w1.dtype).itemsize
    sub = _sublane(x.dtype)

    vmem_cap = _device_vmem_bytes()
    budget = int(0.7 * vmem_cap)
    tm_req = tm if tm is not None else 1024

    if th is None:
        tm_eff, th_eff, resident = _pick_tiles(
            rows, dim_p, hidden, x_it, w_it, budget, tm_req, sub)
    else:
        if hidden % th != 0:
            raise ValueError("th must divide hidden")
        tm_eff = max(sub, (min(_round_up(tm_req, sub), _round_up(rows, sub)) // sub) * sub)
        th_eff, resident = th, (th == hidden)
    if th_eff == hidden:
        resident = True      # never run the tiled kernel with a 1-extent reduction axis

    n_row_tiles = (rows + tm_eff - 1) // tm_eff
    b1_2d = b1.reshape(1, hidden)
    b2_2d = b2.reshape(1, dim_p)

    # Advisory cost estimate (weight bytes use the weight itemsize; tiled path
    # re-streams the weights once per row tile).
    w_stream = 1 if resident else n_row_tiles
    cost = pl.CostEstimate(
        flops=4 * rows * dim_p * hidden,
        transcendentals=rows * hidden,
        bytes_accessed=int(
            2 * rows * dim_p * x_it
            + w_stream * 2 * dim_p * hidden * w_it
            + (hidden + dim_p) * w_it),
    )

    vmem_est = _vmem_bytes(tm_eff, th_eff, dim_p, x_it, w_it, resident)
    vmem_limit = int(min(max(int(vmem_est * 1.25) + (4 << 20), 32 << 20),
                         int(0.9 * vmem_cap)))

    if resident:
        out = pl.pallas_call(
            _ffn_kernel_resident,
            out_shape=jax.ShapeDtypeStruct((rows, dim_p), x.dtype),
            grid_spec=pltpu.PrefetchScalarGridSpec(
                num_scalar_prefetch=0,
                grid=(n_row_tiles,),
                in_specs=[
                    pl.BlockSpec((tm_eff, dim_p), lambda i: (i, 0)),   # x row tile
                    pl.BlockSpec((dim_p, hidden), lambda i: (0, 0)),   # W1 (resident)
                    pl.BlockSpec((1, hidden), lambda i: (0, 0)),       # b1
                    pl.BlockSpec((hidden, dim_p), lambda i: (0, 0)),   # W2 (resident)
                    pl.BlockSpec((1, dim_p), lambda i: (0, 0)),        # b2
                ],
                out_specs=pl.BlockSpec((tm_eff, dim_p), lambda i: (i, 0)),
            ),
            compiler_params=pltpu.CompilerParams(
                dimension_semantics=("parallel",),
                vmem_limit_bytes=vmem_limit,
            ),
            cost_estimate=cost,
        )(x2, w1, b1_2d, w2, b2_2d)
    else:
        nk = hidden // th_eff
        out = pl.pallas_call(
            _ffn_kernel_tiled,
            out_shape=jax.ShapeDtypeStruct((rows, dim_p), x.dtype),
            grid_spec=pltpu.PrefetchScalarGridSpec(
                num_scalar_prefetch=0,
                grid=(n_row_tiles, nk),
                in_specs=[
                    pl.BlockSpec((tm_eff, dim_p), lambda i, k: (i, 0)),  # x row tile
                    pl.BlockSpec((dim_p, th_eff), lambda i, k: (0, k)),  # W1 slice
                    pl.BlockSpec((1, th_eff), lambda i, k: (0, k)),      # b1 slice
                    pl.BlockSpec((th_eff, dim_p), lambda i, k: (k, 0)),  # W2 slice
                    pl.BlockSpec((1, dim_p), lambda i, k: (0, 0)),       # b2
                ],
                out_specs=pl.BlockSpec((tm_eff, dim_p), lambda i, k: (i, 0)),
                scratch_shapes=[pltpu.VMEM((tm_eff, dim_p), jnp.float32)],
            ),
            compiler_params=pltpu.CompilerParams(
                dimension_semantics=("parallel", "arbitrary"),
                vmem_limit_bytes=vmem_limit,
            ),
            cost_estimate=cost,
        )(x2, w1, b1_2d, w2, b2_2d)

    if lane_pad:
        out = out[:, :dim]
    return out.reshape(orig_shape)


def feed_forward_ref(x, w1, b1, w2, b2):
    h = x @ w1 + b1
    h = 0.5 * h * (1.0 + lax.erf(h * _INV_SQRT2))
    return h @ w2 + b2


# --------------------------------- test ------------------------------------ #

if __name__ == "__main__":
    # Shapes consistent with the module: dim=32, mult=4 -> hidden=128.
    B, N, dim, mult = 2, 8, 32, 4
    hidden = dim * mult

    key = jax.random.PRNGKey(0)
    kx, k1, k2, k3, k4 = jax.random.split(key, 5)

    x = jax.random.normal(kx, (B, N, dim), dtype=jnp.float32)
    # PyTorch-Linear-style init: U(-1/sqrt(fan_in), 1/sqrt(fan_in)).
    lim1 = 1.0 / math.sqrt(dim)
    lim2 = 1.0 / math.sqrt(hidden)
    w1 = jax.random.uniform(k1, (dim, hidden), jnp.float32, -lim1, lim1)
    b1 = jax.random.uniform(k2, (hidden,), jnp.float32, -lim1, lim1)
    w2 = jax.random.uniform(k3, (hidden, dim), jnp.float32, -lim2, lim2)
    b2 = jax.random.uniform(k4, (dim,), jnp.float32, -lim2, lim2)

    # Resident-weights path.
    out = jax.block_until_ready(feed_forward(x, w1, b1, w2, b2))
    ref = feed_forward_ref(x, w1, b1, w2, b2)
    assert out.shape == (B, N, dim)
    assert jnp.allclose(out, ref, atol=1e-5, rtol=1e-5), "mismatch vs reference"

    # Row count not a multiple of the row tile (masked partial last tile).
    x_odd = jax.random.normal(kx, (3, 5, dim), dtype=jnp.float32)
    out2 = jax.block_until_ready(feed_forward(x_odd, w1, b1, w2, b2))
    ref2 = feed_forward_ref(x_odd, w1, b1, w2, b2)
    assert jnp.allclose(out2, ref2, atol=1e-5, rtol=1e-5), "mismatch (partial tile)"

    # Hidden-tiled (multi-step accumulator) path, forced via th override.
    hid3 = 256
    w1b = jax.random.uniform(k1, (dim, hid3), jnp.float32, -lim1, lim1)
    b1b = jax.random.uniform(k2, (hid3,), jnp.float32, -lim1, lim1)
    w2b = jax.random.uniform(k3, (hid3, dim), jnp.float32, -1.0 / math.sqrt(hid3),
                             1.0 / math.sqrt(hid3))
    b2b = jax.random.uniform(k4, (dim,), jnp.float32, -1.0 / math.sqrt(hid3),
                             1.0 / math.sqrt(hid3))
    out3 = jax.block_until_ready(feed_forward(x, w1b, b1b, w2b, b2b, th=128))
    ref3 = feed_forward_ref(x, w1b, b1b, w2b, b2b)
    assert jnp.allclose(out3, ref3, atol=1e-5, rtol=1e-5), "mismatch (tiled path)"

    # bf16 smoke test (exercises the narrow-dtype second-GEMM path).
    out4 = jax.block_until_ready(
        feed_forward(x.astype(jnp.bfloat16),
                     w1.astype(jnp.bfloat16), b1.astype(jnp.bfloat16),
                     w2.astype(jnp.bfloat16), b2.astype(jnp.bfloat16)))
    assert out4.dtype == jnp.bfloat16
    assert jnp.allclose(out4.astype(jnp.float32), ref, atol=1e-1, rtol=5e-2), \
        "mismatch (bf16 path)"

    print("KERNEL_OK")
</pallas_src>

<mosaic_0001>
module attributes {stable_mosaic.version = 11 : i64} {
  func.func @_ffn_kernel_resident(%arg0: i32, %arg1: memref<16x128xf32, #tpu.memory_space<vmem>>, %arg2: memref<128x128xf32, #tpu.memory_space<vmem>>, %arg3: memref<1x128xf32, #tpu.memory_space<vmem>>, %arg4: memref<128x128xf32, #tpu.memory_space<vmem>>, %arg5: memref<1x128xf32, #tpu.memory_space<vmem>>, %arg6: memref<16x128xf32, #tpu.memory_space<vmem>>) attributes {dimension_semantics = [#tpu.dimension_semantics<parallel>], iteration_bounds = array<i64: 1>, scalar_prefetch = 0 : i64, scratch_operands = 0 : i64, tpu.core_type = #tpu.core_type<tc>, window_params = [{transform_indices = @transform_0, window_bounds = array<i64: 16, 128>}, {pipeline_mode = #tpu.pipeline_mode<synchronous>, transform_indices = @transform_1, window_bounds = array<i64: 128, 128>}, {pipeline_mode = #tpu.pipeline_mode<synchronous>, transform_indices = @transform_2, window_bounds = array<i64: 1, 128>}, {pipeline_mode = #tpu.pipeline_mode<synchronous>, transform_indices = @transform_3, window_bounds = array<i64: 128, 128>}, {pipeline_mode = #tpu.pipeline_mode<synchronous>, transform_indices = @transform_4, window_bounds = array<i64: 1, 128>}, {transform_indices = @transform_5, window_bounds = array<i64: 16, 128>}]} {
    %c0 = arith.constant 0 : index
    %c0_0 = arith.constant 0 : index
    %0 = vector.load %arg1[%c0, %c0_0] : memref<16x128xf32, #tpu.memory_space<vmem>>, vector<16x128xf32>
    %c0_1 = arith.constant 0 : index
    %c0_2 = arith.constant 0 : index
    %1 = vector.load %arg2[%c0_1, %c0_2] : memref<128x128xf32, #tpu.memory_space<vmem>>, vector<128x128xf32>
    %cst = arith.constant dense<0.000000e+00> : vector<16x128xf32>
    %2 = tpu.matmul %0, %1, %cst {dimension_numbers = #tpu.dot_dimension_numbers<[1], [0], [0], [1], [0, 0, 1, 1], [], []>} : vector<16x128xf32>, vector<128x128xf32>, vector<16x128xf32> -> vector<16x128xf32>
    %c0_3 = arith.constant 0 : index
    %c0_4 = arith.constant 0 : index
    %3 = vector.load %arg3[%c0_3, %c0_4] : memref<1x128xf32, #tpu.memory_space<vmem>>, vector<1x128xf32>
    %4 = vector.broadcast %3 : vector<1x128xf32> to vector<16x128xf32>
    %5 = arith.addf %2, %4 : vector<16x128xf32>
    %cst_5 = arith.constant 5.000000e-01 : f32
    %6 = vector.broadcast %cst_5 : f32 to vector<16x128xf32>
    %7 = arith.mulf %6, %5 : vector<16x128xf32>
    %cst_6 = arith.constant 0.707106769 : f32
    %8 = vector.broadcast %cst_6 : f32 to vector<16x128xf32>
    %9 = arith.mulf %5, %8 : vector<16x128xf32>
    %10 = math.erf %9 : vector<16x128xf32>
    %cst_7 = arith.constant 1.000000e+00 : f32
    %11 = vector.broadcast %cst_7 : f32 to vector<16x128xf32>
    %12 = arith.addf %11, %10 : vector<16x128xf32>
    %13 = arith.mulf %7, %12 : vector<16x128xf32>
    %c0_8 = arith.constant 0 : index
    %c0_9 = arith.constant 0 : index
    %14 = vector.load %arg4[%c0_8, %c0_9] : memref<128x128xf32, #tpu.memory_space<vmem>>, vector<128x128xf32>
    %cst_10 = arith.constant dense<0.000000e+00> : vector<16x128xf32>
    %15 = tpu.matmul %13, %14, %cst_10 {dimension_numbers = #tpu.dot_dimension_numbers<[1], [0], [0], [1], [0, 0, 1, 1], [], []>} : vector<16x128xf32>, vector<128x128xf32>, vector<16x128xf32> -> vector<16x128xf32>
    %c0_11 = arith.constant 0 : index
    %c0_12 = arith.constant 0 : index
    %16 = vector.load %arg5[%c0_11, %c0_12] : memref<1x128xf32, #tpu.memory_space<vmem>>, vector<1x128xf32>
    %17 = vector.broadcast %16 : vector<1x128xf32> to vector<16x128xf32>
    %18 = arith.addf %15, %17 : vector<16x128xf32>
    %c0_13 = arith.constant 0 : index
    %c0_14 = arith.constant 0 : index
    %19 = vector.load %arg6[%c0_13, %c0_14] : memref<16x128xf32, #tpu.memory_space<vmem>>, vector<16x128xf32>
    tpu.vector_store %arg6[%c0_13, %c0_14], %18 {strides = array<i32>} : memref<16x128xf32, #tpu.memory_space<vmem>>, vector<16x128xf32>,
    return
  }
  func.func @transform_0(%arg0: i32) -> (i32, i32) {
    %c0_i32 = arith.constant 0 : i32
    %c0_i32_0 = arith.constant 0 : i32
    return %arg0, %c0_i32 : i32, i32
  }
  func.func @transform_1(%arg0: i32) -> (i32, i32) {
    %c0_i32 = arith.constant 0 : i32
    %c0_i32_0 = arith.constant 0 : i32
    %c0_i32_1 = arith.constant 0 : i32
    return %c0_i32, %c0_i32_0 : i32, i32
  }
  func.func @transform_2(%arg0: i32) -> (i32, i32) {
    %c0_i32 = arith.constant 0 : i32
    %c0_i32_0 = arith.constant 0 : i32
    %c0_i32_1 = arith.constant 0 : i32
    return %c0_i32, %c0_i32_0 : i32, i32
  }
  func.func @transform_3(%arg0: i32) -> (i32, i32) {
    %c0_i32 = arith.constant 0 : i32
    %c0_i32_0 = arith.constant 0 : i32
    %c0_i32_1 = arith.constant 0 : i32
    return %c0_i32, %c0_i32_0 : i32, i32
  }
  func.func @transform_4(%arg0: i32) -> (i32, i32) {
    %c0_i32 = arith.constant 0 : i32
    %c0_i32_0 = arith.constant 0 : i32
    %c0_i32_1 = arith.constant 0 : i32
    return %c0_i32, %c0_i32_0 : i32, i32
  }
  func.func @transform_5(%arg0: i32) -> (i32, i32) {
    %c0_i32 = arith.constant 0 : i32
    %c0_i32_0 = arith.constant 0 : i32
    return %arg0, %c0_i32 : i32, i32
  }
}

</mosaic_0001>

<llo_original>
// kernel: tpu_custom_call.1
$region0: #{tpu_custom_call.1}
  #allocation0 [shape = 'u32[]', space=smem, size = 0x4, offset = 0x4, fixed_abs, tag = 'smem constant byte address 0x4 - core index']
  #allocation1 [shape = 'u32[72,128]{1,0:T(1,128)}', space=vmem, size = 0x9000, scoped, tag = 'internal scratch']
  %s0 = inlined_call_operand.hbm [shape: f32[16,128], index: 0, kind: input, shape index: {}]
  %s1 = inlined_call_operand.hbm [shape: f32[128,128], index: 1, kind: input, shape index: {}]
  %s2 = inlined_call_operand.vmem [shape: f32[1,128], index: 2, kind: input, shape index: {}]
  %s3 = inlined_call_operand.hbm [shape: f32[128,128], index: 3, kind: input, shape index: {}]
  %s4 = inlined_call_operand.vmem [shape: f32[1,128], index: 4, kind: input, shape index: {}]
  %s5 = inlined_call_operand.hbm [shape: f32[16,128], index: 5, kind: output, shape index: {}]
  %s6 = sld [smem:[#allocation0]]
  $region42: #{tpu_custom_call.1} parent=0
    _
  %s8 = ssub.s32 1, %s6
  %s9 = scalar_select 0, %s8, %s6
  $region1: #{tpu_custom_call.1} parent=0
    #allocation2 [shape = 'u8[8192]{0}', space=vmem, size = 0x2000, scoped, tag = 'input window, operand 0, single buffered']
    #allocation3 [shape = 's32[1]{0}', space=sflag, size = 0x4, scoped, tag = 'scoped memory for tpu_custom_call.1']
    #allocation4 [shape = 's32[1]{0}', space=sflag, size = 0x4, scoped, tag = 'scoped memory for tpu_custom_call.1']
    #allocation5 [shape = 'u8[65536]{0}', space=vmem, size = 0x10000, scoped, tag = 'input window, operand 1, single buffered']
    #allocation6 [shape = 's32[1]{0}', space=sflag, size = 0x4, scoped, tag = 'scoped memory for tpu_custom_call.1']
    #allocation7 [shape = 'u8[65536]{0}', space=vmem, size = 0x10000, scoped, tag = 'input window, operand 3, single buffered']
    #allocation8 [shape = 'u8[8192]{0}', space=vmem, size = 0x2000, scoped, tag = 'output window, operand 0, single buffered']
    %10 = vsyncpa [#allocation3], 0
    %11 = vsyncpa [#allocation6], 0
    %12 = vsyncpa [#allocation4], 0
    // Predicated region
    $region2: #{tpu_custom_call.1} parent=1 // pred_check
      _
    $region3: #{tpu_custom_call.1} parent=1 // pred_check_branch
      %14 = sbr.rel (0) target = $region5
    $region4: #{tpu_custom_call.1} parent=1 // pred_region
      %16 = vsyncadd [#allocation3], 0
      %s17 = sshll.u32 %s0, 4
      %s18 = int_to_ptr.hbm [resolvable:$true] %s17
      %s19 = sshll.u32 [#allocation2], 4
      %s20 = int_to_ptr.vmem [resolvable:$true] %s19
      %25 = dma.hbm_to_vmem [thread:$0]  %s18, 256, %s20, [#allocation3], 128, 128, 8
    $region5: #{tpu_custom_call.1} parent=1 // pred_fallthru
      _
    // Predicated region
    $region6: #{tpu_custom_call.1} parent=1 // pred_check
      _
    $region7: #{tpu_custom_call.1} parent=1 // pred_check_branch
      %27 = sbr.rel (0) target = $region9
    $region8: #{tpu_custom_call.1} parent=1 // pred_region
      %29 = vsyncadd [#allocation6], 0
      %s30 = sshll.u32 %s1, 4
      %s31 = int_to_ptr.hbm [resolvable:$true] %s30
      %s32 = sshll.u32 [#allocation5], 4
      %s33 = int_to_ptr.vmem [resolvable:$true] %s32
      %38 = dma.hbm_to_vmem [thread:$0]  %s31, 2048, %s33, [#allocation6], 128, 128, 8
    $region9: #{tpu_custom_call.1} parent=1 // pred_fallthru
      _
    // Predicated region
    $region10: #{tpu_custom_call.1} parent=1 // pred_check
      _
    $region11: #{tpu_custom_call.1} parent=1 // pred_check_branch
      %40 = sbr.rel (0) target = $region13
    $region12: #{tpu_custom_call.1} parent=1 // pred_region
      _
    $region13: #{tpu_custom_call.1} parent=1 // pred_fallthru
      _
    // Predicated region
    $region14: #{tpu_custom_call.1} parent=1 // pred_check
      _
    $region15: #{tpu_custom_call.1} parent=1 // pred_check_branch
      %42 = sbr.rel (0) target = $region17
    $region16: #{tpu_custom_call.1} parent=1 // pred_region
      %44 = vsyncadd [#allocation6], 0
      %s45 = sshll.u32 %s3, 4
      %s46 = int_to_ptr.hbm [resolvable:$true] %s45
      %s47 = sshll.u32 [#allocation7], 4
      %s48 = int_to_ptr.vmem [resolvable:$true] %s47
      %53 = dma.hbm_to_vmem [thread:$0]  %s46, 2048, %s48, [#allocation6], 128, 128, 8
    $region17: #{tpu_custom_call.1} parent=1 // pred_fallthru
      _
    // Predicated region
    $region18: #{tpu_custom_call.1} parent=1 // pred_check
      _
    $region19: #{tpu_custom_call.1} parent=1 // pred_check_branch
      %55 = sbr.rel (0) target = $region21
    $region20: #{tpu_custom_call.1} parent=1 // pred_region
      _
    $region21: #{tpu_custom_call.1} parent=1 // pred_fallthru
      _
    // Predicated region
    $region22: #{tpu_custom_call.1} parent=1 // pred_check
      _
    $region23: #{tpu_custom_call.1} parent=1 // pred_check_branch
      %57 = sbr.rel (0) target = $region25
    $region24: #{tpu_custom_call.1} parent=1 // pred_region
      %59 = dma.done [#allocation3], 256
    $region25: #{tpu_custom_call.1} parent=1 // pred_fallthru
      _
    // Predicated region
    $region26: #{tpu_custom_call.1} parent=1 // pred_check
      _
    $region27: #{tpu_custom_call.1} parent=1 // pred_check_branch
      %61 = sbr.rel (0) target = $region29
    $region28: #{tpu_custom_call.1} parent=1 // pred_region
      %63 = dma.done [#allocation6], 2048
    $region29: #{tpu_custom_call.1} parent=1 // pred_fallthru
      _
    // Predicated region
    $region30: #{tpu_custom_call.1} parent=1 // pred_check
      _
    $region31: #{tpu_custom_call.1} parent=1 // pred_check_branch
      %65 = sbr.rel (0) target = $region33
    $region32: #{tpu_custom_call.1} parent=1 // pred_region
      %67 = dma.done [#allocation6], 2048
    $region33: #{tpu_custom_call.1} parent=1 // pred_fallthru
      _
    %v68 = vld [vmem:[#allocation2] sm:$0xff]
    %v69 = vld [vmem:[#allocation2 + $0x8] sm:$0xff]
    %v70 = vld [vmem:[#allocation5] sm:$0xff]
    %v71 = vld [vmem:[#allocation5 + $0x8] sm:$0xff]
    %v72 = vld [vmem:[#allocation5 + $0x10] sm:$0xff]
    %v73 = vld [vmem:[#allocation5 + $0x18] sm:$0xff]
    %v74 = vld [vmem:[#allocation5 + $0x20] sm:$0xff]
    %v75 = vld [vmem:[#allocation5 + $0x28] sm:$0xff]
    %v76 = vld [vmem:[#allocation5 + $0x30] sm:$0xff]
    %v77 = vld [vmem:[#allocation5 + $0x38] sm:$0xff]
    %v78 = vld [vmem:[#allocation5 + $0x40] sm:$0xff]
    %v79 = vld [vmem:[#allocation5 + $0x48] sm:$0xff]
    %v80 = vld [vmem:[#allocation5 + $0x50] sm:$0xff]
    %v81 = vld [vmem:[#allocation5 + $0x58] sm:$0xff]
    %v82 = vld [vmem:[#allocation5 + $0x60] sm:$0xff]
    %v83 = vld [vmem:[#allocation5 + $0x68] sm:$0xff]
    %v84 = vld [vmem:[#allocation5 + $0x70] sm:$0xff]
    %v85 = vld [vmem:[#allocation5 + $0x78] sm:$0xff]
    %v86 = vld [vmem:[%s2] sm:$0x1]
    %v88 = vperm.slane %v86, 0
    %90 = vmatpush.msra.mxu0 %v85
    %91 = vmatpush.msra.mxu0 %v84
    %92 = vmatpush.msra.mxu0 %v83
    %93 = vmatpush.msra.mxu0 %v82
    %94 = vmatpush.msra.mxu0 %v81
    %95 = vmatpush.msra.mxu0 %v80
    %96 = vmatpush.msra.mxu0 %v79
    %97 = vmatpush.msra.mxu0 %v78
    %98 = vmatpush.msra.mxu0 %v77
    %99 = vmatpush.msra.mxu0 %v76
    %100 = vmatpush.msra.mxu0 %v75
    %101 = vmatpush.msra.mxu0 %v74
    %102 = vmatpush.msra.mxu0 %v73
    %103 = vmatpush.msra.mxu0 %v72
    %104 = vmatpush.msra.mxu0 %v71
    %105 = vmatpush.msra.mxu0 %v70
    %106 = vmatmul.f32.gmra.mxu0 %v68
    %v107 = vpop.f32.mrf.mxu0
    %v108 = vadd.f32 %v88, %v107
    %109 = vmatmul.f32.gmra.mxu0 %v69
    %v110 = vpop.f32.mrf.mxu0
    %v111 = vadd.f32 %v88, %v110
    %112 = vdwg.mxu0
    %v113 = vmul.f32 %v108, 0.5
    %v114 = vmul.f32 %v111, 0.5
    %v115 = vmul.f32 %v108, 0.70710677
    %v116 = vmul.f32 %v111, 0.70710677
    %v117 = vmul.f32 %v115, %v115
    %v118 = vmin.f32 16.0, %v117
    %v119 = vmul.f32 %v118, 2.1237322e-06
    %v120 = vadd.f32 %v119, 0.00028619796
    %v121 = vmul.f32 %v118, %v120
    %v122 = vadd.f32 %v121, 0.0036580483
    %v123 = vmul.f32 %v118, %v122
    %v124 = vadd.f32 %v123, 0.05243302
    %v125 = vmul.f32 %v118, %v124
    %v126 = vadd.f32 %v125, 0.18741608
    %v127 = vmul.f32 %v118, %v126
    %v128 = vadd.f32 %v127, 1.1283791
    %v129 = vmul.f32 %v115, %v128
    %v130 = vmul.f32 %v118, 3.8918573e-05
    %v131 = vadd.f32 %v130, 0.001143296
    %v132 = vmul.f32 %v118, %v131
    %v133 = vadd.f32 %v132, 0.014752088
    %v134 = vmul.f32 %v118, %v133
    %v135 = vadd.f32 %v134, 0.112945676
    %v136 = vmul.f32 %v118, %v135
    %v137 = vadd.f32 %v136, 0.4994258
    %v138 = vmul.f32 %v118, %v137
    %v139 = vadd.f32 %v138, 1.0
    %v140 = vrcp.pop %v139
    %v141 = vmul.f32 %v139, %v140
    %v142 = vsub.f32 1.0, %v141
    %v143 = vmul.f32 %v140, %v142
    %v144 = vadd.f32 %v140, %v143
    %vm145 = vweird.f32 %v139
    %vm146 = vweird.f32 %v140
    %vm147 = vmor %vm145, %vm146
    %v148 = vsel %vm147, %v140, %v144
    %v149 = vand.u32 2147483647, %v139
    %vm150 = vcmp.eq.f32.partialorder %v149, 8.507059e+37
    %v151 = vand.u32 %v139, 2147483648
    %v152 = vor.u32 1.1754944e-38, %v151
    %v153 = vsel %vm150, %v152, %v148
    %v154 = vmul.f32 %v129, %v153
    %v155 = vmin.f32 %v154, 1.0
    %v156 = vmax.f32 %v155, -1.0
    %v157 = vmul.f32 %v116, %v116
    %v158 = vmin.f32 16.0, %v157
    %v159 = vmul.f32 %v158, 2.1237322e-06
    %v160 = vadd.f32 %v159, 0.00028619796
    %v161 = vmul.f32 %v158, %v160
    %v162 = vadd.f32 %v161, 0.0036580483
    %v163 = vmul.f32 %v158, %v162
    %v164 = vadd.f32 %v163, 0.05243302
    %v165 = vmul.f32 %v158, %v164
    %v166 = vadd.f32 %v165, 0.18741608
    %v167 = vmul.f32 %v158, %v166
    %v168 = vadd.f32 %v167, 1.1283791
    %v169 = vmul.f32 %v116, %v168
    %v170 = vmul.f32 %v158, 3.8918573e-05
    %v171 = vadd.f32 %v170, 0.001143296
    %v172 = vmul.f32 %v158, %v171
    %v173 = vadd.f32 %v172, 0.014752088
    %v174 = vmul.f32 %v158, %v173
    %v175 = vadd.f32 %v174, 0.112945676
    %v176 = vmul.f32 %v158, %v175
    %v177 = vadd.f32 %v176, 0.4994258
    %v178 = vmul.f32 %v158, %v177
    %v179 = vadd.f32 %v178, 1.0
    %v180 = vrcp.pop %v179
    %v181 = vmul.f32 %v179, %v180
    %v182 = vsub.f32 1.0, %v181
    %v183 = vmul.f32 %v180, %v182
    %v184 = vadd.f32 %v180, %v183
    %vm185 = vweird.f32 %v179
    %vm186 = vweird.f32 %v180
    %vm187 = vmor %vm185, %vm186
    %v188 = vsel %vm187, %v180, %v184
    %v189 = vand.u32 2147483647, %v179
    %vm190 = vcmp.eq.f32.partialorder %v189, 8.507059e+37
    %v191 = vand.u32 %v179, 2147483648
    %v192 = vor.u32 1.1754944e-38, %v191
    %v193 = vsel %vm190, %v192, %v188
    %v194 = vmul.f32 %v169, %v193
    %v195 = vmin.f32 %v194, 1.0
    %v196 = vmax.f32 %v195, -1.0
    %v197 = vadd.f32 %v156, 1.0
    %v198 = vadd.f32 %v196, 1.0
    %v199 = vmul.f32 %v113, %v197
    %v200 = vmul.f32 %v114, %v198
    %v201 = vld [vmem:[#allocation7] sm:$0xff]
    %v202 = vld [vmem:[#allocation7 + $0x8] sm:$0xff]
    %v203 = vld [vmem:[#allocation7 + $0x10] sm:$0xff]
    %v204 = vld [vmem:[#allocation7 + $0x18] sm:$0xff]
    %v205 = vld [vmem:[#allocation7 + $0x20] sm:$0xff]
    %v206 = vld [vmem:[#allocation7 + $0x28] sm:$0xff]
    %v207 = vld [vmem:[#allocation7 + $0x30] sm:$0xff]
    %v208 = vld [vmem:[#allocation7 + $0x38] sm:$0xff]
    %v209 = vld [vmem:[#allocation7 + $0x40] sm:$0xff]
    %v210 = vld [vmem:[#allocation7 + $0x48] sm:$0xff]
    %v211 = vld [vmem:[#allocation7 + $0x50] sm:$0xff]
    %v212 = vld [vmem:[#allocation7 + $0x58] sm:$0xff]
    %v213 = vld [vmem:[#allocation7 + $0x60] sm:$0xff]
    %v214 = vld [vmem:[#allocation7 + $0x68] sm:$0xff]
    %v215 = vld [vmem:[#allocation7 + $0x70] sm:$0xff]
    %v216 = vld [vmem:[#allocation7 + $0x78] sm:$0xff]
    %v217 = vld [vmem:[%s4] sm:$0x1]
    %v219 = vperm.slane %v217, 0
    %221 = vmatpush.msra.mxu0 %v216
    %222 = vmatpush.msra.mxu0 %v215
    %223 = vmatpush.msra.mxu0 %v214
    %224 = vmatpush.msra.mxu0 %v213
    %225 = vmatpush.msra.mxu0 %v212
    %226 = vmatpush.msra.mxu0 %v211
    %227 = vmatpush.msra.mxu0 %v210
    %228 = vmatpush.msra.mxu0 %v209
    %229 = vmatpush.msra.mxu0 %v208
    %230 = vmatpush.msra.mxu0 %v207
    %231 = vmatpush.msra.mxu0 %v206
    %232 = vmatpush.msra.mxu0 %v205
    %233 = vmatpush.msra.mxu0 %v204
    %234 = vmatpush.msra.mxu0 %v203
    %235 = vmatpush.msra.mxu0 %v202
    %236 = vmatpush.msra.mxu0 %v201
    %237 = vmatmul.f32.gmra.mxu0 %v199
    %v238 = vpop.f32.mrf.mxu0
    %v239 = vadd.f32 %v219, %v238
    %240 = vmatmul.f32.gmra.mxu0 %v200
    %v241 = vpop.f32.mrf.mxu0
    %v242 = vadd.f32 %v219, %v241
    %243 = vdwg.mxu0
    %244 = vst [vmem:[#allocation8] sm:$0xff] %v239
    %245 = vst [vmem:[#allocation8 + $0x8] sm:$0xff] %v242
    // Predicated region
    $region34: #{tpu_custom_call.1} parent=1 // pred_check
      _
    $region35: #{tpu_custom_call.1} parent=1 // pred_check_branch
      %247 = sbr.rel (0) target = $region37
    $region36: #{tpu_custom_call.1} parent=1 // pred_region
      %249 = vsyncadd [#allocation4], 0
      %s250 = sshll.u32 [#allocation8], 4
      %s251 = int_to_ptr.vmem [resolvable:$true] %s250
      %s252 = sshll.u32 %s5, 4
      %s253 = int_to_ptr.hbm [resolvable:$true] %s252
      %258 = dma.vmem_to_hbm [thread:$0]  %s251, 256, %s253, [#allocation4], 128, 128, 8
    $region37: #{tpu_custom_call.1} parent=1 // pred_fallthru
      _
    // Predicated region
    $region38: #{tpu_custom_call.1} parent=1 // pred_check
      _
    $region39: #{tpu_custom_call.1} parent=1 // pred_check_branch
      %260 = sbr.rel (0) target = $region41
    $region40: #{tpu_custom_call.1} parent=1 // pred_region
      %262 = dma.done [#allocation4], 256
    $region41: #{tpu_custom_call.1} parent=1 // pred_fallthru
      _
    %263 = vsyncpa [#allocation3], 1
    %264 = vsyncpa [#allocation6], 1
    %265 = vsyncpa [#allocation4], 1

</llo_original>
